<compile_context>
chip_gen: v6e
topology: v6e:2x2x1
jax: 0.10.0
libtpu: 0.0.40
codegen_flags: <defaults>
</compile_context>

<pallas_src>
import functools

import jax
import jax.numpy as jnp
from jax.experimental import pallas as pl
from jax.experimental.pallas import tpu as pltpu


def _rms_ln_kernel(x_ref, w_ref, b_ref, o_ref, *, eps):
    # Reduction goes to the XLU, rsqrt to the EUP, affine to the VPU — all off the
    # critical (vld/vst + DMA) path for this bandwidth-bound op.
    x32 = x_ref[...].astype(jnp.float32)
    var = jnp.mean(x32 * x32, axis=-1, keepdims=True)
    xn = x32 * jax.lax.rsqrt(var + eps)
    xn = xn.astype(x_ref.dtype)          # mirrors `x = x.to(og_dtype)` in the module
    w = w_ref[...]                        # (1, D) weight, broadcasts over rows
    b = b_ref[...]                        # (1, D) bias
    o_ref[...] = (w * xn + b).astype(o_ref.dtype)


def _pick_row_tile(rows, d, in_dtype, out_dtype,
                   per_step_budget_bytes=16 << 20, max_rows=1024):
    """Largest row tile whose (input + output) tile fits the per-step VMEM budget."""
    in_item = jnp.dtype(in_dtype).itemsize
    out_item = jnp.dtype(out_dtype).itemsize
    # sublane packing granularity: 8 rows for 4-byte, 16 for 2-byte, 32 for 1-byte
    sublane = {4: 8, 2: 16, 1: 32}.get(in_item, 8)
    per_row_bytes = d * (in_item + out_item)
    tile = (per_step_budget_bytes // per_row_bytes) // sublane * sublane
    tile = max(sublane, min(tile, max_rows))
    # Keep >= 2 grid steps when the input is big enough, so both v7x TensorCores
    # (sharded via the "parallel" grid axis) get work.
    if rows > sublane:
        half = pl.cdiv(rows, 2)
        cap = ((half + sublane - 1) // sublane) * sublane
        tile = min(tile, cap)
    return max(tile, sublane)


def rms_layer_norm(x, weight=None, bias=None, *, eps=1e-5, row_tile=None):
    """x: (rows, d_model); weight/bias: (d_model,) or None. Returns (rows, d_model)."""
    rows, d = x.shape

    # weight=None => identity scale (torch returns x directly); bias=None => zero bias.
    if weight is None:
        weight = jnp.ones((d,), dtype=x.dtype)
    if bias is None:
        bias = jnp.zeros((d,), dtype=weight.dtype)

    # Output dtype follows promotion of (weight * x_cast_back + bias), as in torch.
    # (For bf16 activations with bf16 params, output stays bf16 => half the writeback.)
    out_dtype = jnp.promote_types(jnp.promote_types(weight.dtype, x.dtype), bias.dtype)

    if row_tile is None:
        row_tile = _pick_row_tile(rows, d, x.dtype, out_dtype)

    # Pad ragged row counts to a multiple of row_tile (cheaper than tiny tiles).
    num_tiles = pl.cdiv(rows, row_tile)
    padded_rows = num_tiles * row_tile
    if padded_rows != rows:
        x = jnp.pad(x, ((0, padded_rows - rows), (0, 0)))

    w2 = weight.reshape(1, d).astype(out_dtype)
    b2 = bias.reshape(1, d).astype(out_dtype)

    # VMEM budget: double-buffered in + out tiles, params, plus margin.
    in_item = jnp.dtype(x.dtype).itemsize
    out_item = jnp.dtype(out_dtype).itemsize
    tile_bytes = row_tile * d * (in_item + out_item)
    vmem_limit = 2 * tile_bytes + 4 * d * out_item + (4 << 20)
    vmem_limit = int(min(max(vmem_limit, 16 << 20), 48 << 20))  # safe on v7x (64 MiB)

    kernel = functools.partial(_rms_ln_kernel, eps=eps)
    out = pl.pallas_call(
        kernel,
        out_shape=jax.ShapeDtypeStruct((padded_rows, d), out_dtype),
        grid_spec=pl.GridSpec(
            grid=(num_tiles,),
            in_specs=[
                pl.BlockSpec((row_tile, d), lambda i: (i, 0)),  # x tile
                pl.BlockSpec((1, d), lambda i: (0, 0)),         # weight (resident)
                pl.BlockSpec((1, d), lambda i: (0, 0)),         # bias (resident)
            ],
            out_specs=pl.BlockSpec((row_tile, d), lambda i: (i, 0)),
        ),
        compiler_params=pltpu.CompilerParams(
            dimension_semantics=("parallel",),
            vmem_limit_bytes=vmem_limit,
        ),
    )(x, w2, b2)

    if padded_rows != rows:
        out = out[:rows]
    return out


def rms_layer_norm_ref(x, weight, bias, eps=1e-5):
    og_dtype = x.dtype
    x32 = x.astype(jnp.float32)
    var = jnp.mean(x32 * x32, axis=-1, keepdims=True)
    xn = (x32 * jax.lax.rsqrt(var + eps)).astype(og_dtype)
    return weight * xn + bias


if __name__ == "__main__":
    eps = 1e-5
    key = jax.random.PRNGKey(0)

    # Case 1: small shapes consistent with the module: batch=2, seq=8, d_model=128.
    B, S, D = 2, 8, 128
    k1, k2 = jax.random.split(key)
    x = jax.random.normal(k1, (B, S, D), dtype=jnp.float32)
    weight = jnp.ones((D,), dtype=jnp.float32)   # matches nn.Parameter(ones)
    bias = jnp.zeros((D,), dtype=jnp.float32)    # matches nn.Parameter(zeros)

    x2d = x.reshape(B * S, D)
    out2d = rms_layer_norm(x2d, weight, bias, eps=eps)
    out = out2d.reshape(B, S, D)
    jax.block_until_ready(out)

    ref = rms_layer_norm_ref(x, weight, bias, eps=eps)
    assert out.shape == ref.shape and out.dtype == ref.dtype
    assert jnp.allclose(out, ref, atol=1e-5, rtol=1e-5)

    # Case 2: ragged row count (exercises the padding / tail path).
    rows2 = 15  # not a multiple of the row tile
    x_r = jax.random.normal(k2, (rows2, D), dtype=jnp.float32)
    w_r = 0.5 + jax.random.uniform(k2, (D,), dtype=jnp.float32)
    b_r = jax.random.normal(jax.random.PRNGKey(1), (D,), dtype=jnp.float32) * 0.1
    out_r = rms_layer_norm(x_r, w_r, b_r, eps=eps)
    jax.block_until_ready(out_r)
    ref_r = rms_layer_norm_ref(x_r, w_r, b_r, eps=eps)
    assert out_r.shape == ref_r.shape and out_r.dtype == ref_r.dtype
    assert jnp.allclose(out_r, ref_r, atol=1e-5, rtol=1e-5)

    print("KERNEL_OK")
</pallas_src>

<mosaic_0001>
module attributes {stable_mosaic.version = 11 : i64} {
  func.func @_rms_ln_kernel(%arg0: i32, %arg1: memref<8x128xf32, #tpu.memory_space<vmem>>, %arg2: memref<1x128xf32, #tpu.memory_space<vmem>>, %arg3: memref<1x128xf32, #tpu.memory_space<vmem>>, %arg4: memref<8x128xf32, #tpu.memory_space<vmem>>) attributes {dimension_semantics = [#tpu.dimension_semantics<parallel>], iteration_bounds = array<i64: 2>, scalar_prefetch = 0 : i64, scratch_operands = 0 : i64, tpu.core_type = #tpu.core_type<tc>, window_params = [{transform_indices = @transform_0, window_bounds = array<i64: 8, 128>}, {pipeline_mode = #tpu.pipeline_mode<synchronous>, transform_indices = @transform_1, window_bounds = array<i64: 1, 128>}, {pipeline_mode = #tpu.pipeline_mode<synchronous>, transform_indices = @transform_2, window_bounds = array<i64: 1, 128>}, {transform_indices = @transform_3, window_bounds = array<i64: 8, 128>}]} {
    %c0 = arith.constant 0 : index
    %c0_0 = arith.constant 0 : index
    %0 = vector.load %arg1[%c0, %c0_0] : memref<8x128xf32, #tpu.memory_space<vmem>>, vector<8x128xf32>
    %1 = arith.mulf %0, %0 : vector<8x128xf32>
    %cst = arith.constant dense<0.000000e+00> : vector<8xf32>
    %2 = vector.multi_reduction <add>, %1, %cst [1] : vector<8x128xf32> to vector<8xf32>
    %3 = vector.shape_cast %2 : vector<8xf32> to vector<8x1xf32>
    %cst_1 = arith.constant 1.280000e+02 : f32
    %4 = vector.broadcast %cst_1 : f32 to vector<8x1xf32>
    %5 = arith.divf %3, %4 : vector<8x1xf32>
    %cst_2 = arith.constant 9.99999974E-6 : f32
    %6 = vector.broadcast %cst_2 : f32 to vector<8x1xf32>
    %7 = arith.addf %5, %6 : vector<8x1xf32>
    %8 = math.rsqrt %7 : vector<8x1xf32>
    %9 = vector.broadcast %8 : vector<8x1xf32> to vector<8x128xf32>
    %10 = arith.mulf %0, %9 : vector<8x128xf32>
    %c0_3 = arith.constant 0 : index
    %c0_4 = arith.constant 0 : index
    %11 = vector.load %arg2[%c0_3, %c0_4] : memref<1x128xf32, #tpu.memory_space<vmem>>, vector<1x128xf32>
    %c0_5 = arith.constant 0 : index
    %c0_6 = arith.constant 0 : index
    %12 = vector.load %arg3[%c0_5, %c0_6] : memref<1x128xf32, #tpu.memory_space<vmem>>, vector<1x128xf32>
    %13 = vector.broadcast %11 : vector<1x128xf32> to vector<8x128xf32>
    %14 = arith.mulf %13, %10 : vector<8x128xf32>
    %15 = vector.broadcast %12 : vector<1x128xf32> to vector<8x128xf32>
    %16 = arith.addf %14, %15 : vector<8x128xf32>
    %c0_7 = arith.constant 0 : index
    %c0_8 = arith.constant 0 : index
    %17 = vector.load %arg4[%c0_7, %c0_8] : memref<8x128xf32, #tpu.memory_space<vmem>>, vector<8x128xf32>
    tpu.vector_store %arg4[%c0_7, %c0_8], %16 {strides = array<i32>} : memref<8x128xf32, #tpu.memory_space<vmem>>, vector<8x128xf32>,
    return
  }
  func.func @transform_0(%arg0: i32) -> (i32, i32) {
    %c0_i32 = arith.constant 0 : i32
    %c0_i32_0 = arith.constant 0 : i32
    return %arg0, %c0_i32 : i32, i32
  }
  func.func @transform_1(%arg0: i32) -> (i32, i32) {
    %c0_i32 = arith.constant 0 : i32
    %c0_i32_0 = arith.constant 0 : i32
    %c0_i32_1 = arith.constant 0 : i32
    return %c0_i32, %c0_i32_0 : i32, i32
  }
  func.func @transform_2(%arg0: i32) -> (i32, i32) {
    %c0_i32 = arith.constant 0 : i32
    %c0_i32_0 = arith.constant 0 : i32
    %c0_i32_1 = arith.constant 0 : i32
    return %c0_i32, %c0_i32_0 : i32, i32
  }
  func.func @transform_3(%arg0: i32) -> (i32, i32) {
    %c0_i32 = arith.constant 0 : i32
    %c0_i32_0 = arith.constant 0 : i32
    return %arg0, %c0_i32 : i32, i32
  }
}

</mosaic_0001>

<llo_original>
// kernel: tpu_custom_call.1
$region0: #{tpu_custom_call.1}
  #allocation0 [shape = 'u32[]', space=smem, size = 0x4, offset = 0x4, fixed_abs, tag = 'smem constant byte address 0x4 - core index']
  #allocation1 [shape = 'u32[144,128]{1,0:T(1,128)}', space=vmem, size = 0x12000, scoped, tag = 'internal scratch']
  %s0 = inlined_call_operand.hbm [shape: f32[16,128], index: 0, kind: input, shape index: {}]
  %s1 = inlined_call_operand.vmem [shape: f32[1,128], index: 1, kind: input, shape index: {}]
  %s2 = inlined_call_operand.vmem [shape: f32[1,128], index: 2, kind: input, shape index: {}]
  %s3 = inlined_call_operand.hbm [shape: f32[16,128], index: 3, kind: output, shape index: {}]
  %s4 = sld [smem:[#allocation0]]
  $region49: #{tpu_custom_call.1} parent=0
    _
  %s6 = ssub.s32 1, %s4
  %s7 = scalar_select 0, %s6, %s4
  $region1: #{tpu_custom_call.1} parent=0
    #allocation2 [shape = 'u8[8192]{0}', space=vmem, size = 0x2000, scoped, tag = 'input window, operand 0']
    #allocation3 [shape = 's32[2]{0}', space=sflag, size = 0x8, scoped, tag = 'scoped memory for tpu_custom_call.1']
    #allocation4 [shape = 's32[2]{0}', space=sflag, size = 0x8, scoped, tag = 'scoped memory for tpu_custom_call.1']
    #allocation5 [shape = 'u8[8192]{0}', space=vmem, size = 0x2000, scoped, tag = 'output window, operand 0']
    %8 = vsyncpa [#allocation3], 0
    %s9 = scalar_lea.sflag [#allocation3], 1
    %10 = vsyncpa %s9, 0
    %11 = vsyncpa [#allocation4], 0
    %s12 = scalar_lea.sflag [#allocation4], 1
    %13 = vsyncpa %s12, 0
    loop: start=0, step=1, limit=4
    $region2: #{tpu_custom_call.1} parent=1 // loop_pre_header
      _
    $region3: #{tpu_custom_call.1} parent=1 // loop_header
      %s15 = sphi 0, %s19
      %p16 = scmp.ge.s32.totalorder %s15, 4
      %s25 = sphi 0, %s27
      %s28 = sphi 0, %s25
      %s29 = sphi 0, %s28
      %s45 = sphi 0, %s29
      %s49 = sphi 0, %s49
      %s51 = sphi 0, %s49
      %s52 = sphi 0, %s51
      %s66 = sphi 0, %s52
      %s70 = sphi 0, %s70
      %s72 = sphi 0, %s70
      %s73 = sphi 0, %s72
      %s87 = sphi 0, %s73
      %s93 = sphi 0, %s95
      %s96 = sphi 0, %s93
      %s97 = sphi 0, %s96
      %s113 = sphi 0, %s97
    $region4: #{tpu_custom_call.1} parent=1 // loop_header_branch
      %18 = sbr.rel (%p16) target = $region8
    $region5: #{tpu_custom_call.1} parent=1 // loop_body
      %s20 = ssub.s32 %s15, 1
      %s21 = ssub.s32 %s15, 2
      %s22 = sadd.s32 %s15, 1
      %s23 = ssub.s32 %s15, %s22
      %p24 = scmp.eq.s32.totalorder %s23, 0
      %s26 = sadd.s32 %s25, 1
      %s27 = scalar_select %p24, %s25, %s26
      %p30 = pneg %p24
      %p31 = scmp.eq.s32.totalorder %s15, 1
      %p32 = por %p30, %p31
      %p33 = scmp.ne.s32.totalorder %s25, %s28
      %p34 = scmp.eq.s32.totalorder %s15, 0
      %p35 = por %p33, %p34
      %p36 = scmp.ne.s32.totalorder %s25, %s28
      %p37 = scmp.eq.s32.totalorder %s20, 1
      %p38 = por %p36, %p37
      %p39 = scmp.ne.s32.totalorder %s28, %s29
      %p40 = scmp.eq.s32.totalorder %s20, 0
      %p41 = por %p39, %p40
      %p42 = scmp.ne.s32.totalorder %s28, %s29
      %p43 = scmp.eq.s32.totalorder %s21, 1
      %p44 = por %p42, %p43
      %p46 = scmp.ne.s32.totalorder %s29, %s45
      %p47 = scmp.eq.s32.totalorder %s21, 0
      %p48 = por %p46, %p47
      %s50 = sadd.s32 %s49, 1
      %p53 = scmp.eq.s32.totalorder %s15, 1
      %p54 = scmp.ne.s32.totalorder %s49, %s51
      %p55 = scmp.eq.s32.totalorder %s15, 0
      %p56 = por %p54, %p55
      %p57 = scmp.ne.s32.totalorder %s49, %s51
      %p58 = scmp.eq.s32.totalorder %s20, 1
      %p59 = por %p57, %p58
      %p60 = scmp.ne.s32.totalorder %s51, %s52
      %p61 = scmp.eq.s32.totalorder %s20, 0
      %p62 = por %p60, %p61
      %p63 = scmp.ne.s32.totalorder %s51, %s52
      %p64 = scmp.eq.s32.totalorder %s21, 1
      %p65 = por %p63, %p64
      %p67 = scmp.ne.s32.totalorder %s52, %s66
      %p68 = scmp.eq.s32.totalorder %s21, 0
      %p69 = por %p67, %p68
      %s71 = sadd.s32 %s70, 1
      %p74 = scmp.eq.s32.totalorder %s15, 1
      %p75 = scmp.ne.s32.totalorder %s70, %s72
      %p76 = scmp.eq.s32.totalorder %s15, 0
      %p77 = por %p75, %p76
      %p78 = scmp.ne.s32.totalorder %s70, %s72
      %p79 = scmp.eq.s32.totalorder %s20, 1
      %p80 = por %p78, %p79
      %p81 = scmp.ne.s32.totalorder %s72, %s73
      %p82 = scmp.eq.s32.totalorder %s20, 0
      %p83 = por %p81, %p82
      %p84 = scmp.ne.s32.totalorder %s72, %s73
      %p85 = scmp.eq.s32.totalorder %s21, 1
      %p86 = por %p84, %p85
      %p88 = scmp.ne.s32.totalorder %s73, %s87
      %p89 = scmp.eq.s32.totalorder %s21, 0
      %p90 = por %p88, %p89
      %s91 = ssub.s32 %s15, %s22
      %p92 = scmp.eq.s32.totalorder %s91, 0
      %s94 = sadd.s32 %s93, 1
      %s95 = scalar_select %p92, %s93, %s94
      %p98 = pneg %p92
      %p99 = scmp.eq.s32.totalorder %s15, 1
      %p100 = por %p98, %p99
      %p101 = scmp.ne.s32.totalorder %s93, %s96
      %p102 = scmp.eq.s32.totalorder %s15, 0
      %p103 = por %p101, %p102
      %p104 = scmp.ne.s32.totalorder %s93, %s96
      %p105 = scmp.eq.s32.totalorder %s20, 1
      %p106 = por %p104, %p105
      %p107 = scmp.ne.s32.totalorder %s96, %s97
      %p108 = scmp.eq.s32.totalorder %s20, 0
      %p109 = por %p107, %p108
      %p110 = scmp.ne.s32.totalorder %s96, %s97
      %p111 = scmp.eq.s32.totalorder %s21, 1
      %p112 = por %p110, %p111
      %p114 = scmp.ne.s32.totalorder %s97, %s113
      %p115 = scmp.eq.s32.totalorder %s21, 0
      %p116 = por %p114, %p115
      %p117 = scmp.le.s32.totalorder 1, %s15
      %p118 = scmp.lt.s32.totalorder %s15, 3
      %p119 = pnand %p117, %p118
      %p120 = pneg %p119
      // Predicated region
      $region9: #{tpu_custom_call.1} parent=5 // pred_check
        _
      $region10: #{tpu_custom_call.1} parent=5 // pred_check_branch
        %122 = sbr.rel (%p119) target = $region12
      $region11: #{tpu_custom_call.1} parent=5 // pred_region
        %s123 = ssub.s32 %s15, 1
        // Predicated region
        $region13: #{tpu_custom_call.1} parent=11 // pred_check
          %p124 = pneg %p62
        $region14: #{tpu_custom_call.1} parent=11 // pred_check_branch
          %126 = sbr.rel (%p124) target = $region16
        $region15: #{tpu_custom_call.1} parent=11 // pred_region
          _
        $region16: #{tpu_custom_call.1} parent=11 // pred_fallthru
          _
        // Predicated region
        $region17: #{tpu_custom_call.1} parent=11 // pred_check
          %p127 = pneg %p83
        $region18: #{tpu_custom_call.1} parent=11 // pred_check_branch
          %129 = sbr.rel (%p127) target = $region20
        $region19: #{tpu_custom_call.1} parent=11 // pred_region
          _
        $region20: #{tpu_custom_call.1} parent=11 // pred_fallthru
          _
      $region12: #{tpu_custom_call.1} parent=5 // pred_fallthru
        _
      %p130 = scmp.lt.s32.totalorder %s15, 2
      // Predicated region
      $region21: #{tpu_custom_call.1} parent=5 // pred_check
        %p131 = pneg %p130
      $region22: #{tpu_custom_call.1} parent=5 // pred_check_branch
        %133 = sbr.rel (%p131) target = $region24
      $region23: #{tpu_custom_call.1} parent=5 // pred_region
        // Predicated region
        $region25: #{tpu_custom_call.1} parent=23 // pred_check
          %p134 = pneg %p35
        $region26: #{tpu_custom_call.1} parent=23 // pred_check_branch
          %136 = sbr.rel (%p134) target = $region28
        $region27: #{tpu_custom_call.1} parent=23 // pred_region
          %s137 = sand.u32 %s25, 1
          %s138 = scalar_lea.sflag [#allocation3], %s137
          %s139 = sand.u32 %s25, 1
          %s140 = smul.addr %s139, 8
          %s141 = scalar_lea.vmem [#allocation2], %s140
          %s143 = ssub.s32 128, 128
          %144 = vsyncadd %s138, %s143
          %s145 = smul.addr %s15, 128
          %s146 = scalar_lea.hbm %s0, %s145
          %s148 = sshll.u32 %s141, 4
          %s149 = int_to_ptr.vmem [resolvable:$true] %s148
          %151 = dma.hbm_to_vmem [thread:$0]  %s146, 128, %s149, %s138
        $region28: #{tpu_custom_call.1} parent=23 // pred_fallthru
          _
      $region24: #{tpu_custom_call.1} parent=5 // pred_fallthru
        _
      %p152 = scmp.le.s32.totalorder 1, %s15
      %p153 = scmp.lt.s32.totalorder %s15, 3
      %p154 = pnand %p152, %p153
      %p155 = pneg %p154
      // Predicated region
      $region29: #{tpu_custom_call.1} parent=5 // pred_check
        _
      $region30: #{tpu_custom_call.1} parent=5 // pred_check_branch
        %157 = sbr.rel (%p154) target = $region32
      $region31: #{tpu_custom_call.1} parent=5 // pred_region
        %s158 = ssub.s32 %s15, 1
        %s159 = sand.u32 %s28, 1
        %s160 = scalar_lea.sflag [#allocation3], %s159
        %s161 = sand.u32 %s28, 1
        %s162 = smul.addr %s161, 8
        %s163 = scalar_lea.vmem [#allocation2], %s162
        // Predicated region
        $region33: #{tpu_custom_call.1} parent=31 // pred_check
          %p164 = pneg %p41
        $region34: #{tpu_custom_call.1} parent=31 // pred_check_branch
          %166 = sbr.rel (%p164) target = $region36
        $region35: #{tpu_custom_call.1} parent=31 // pred_region
          %167 = dma.done %s160, 128
        $region36: #{tpu_custom_call.1} parent=31 // pred_fallthru
          _
        %s168 = sand.u32 %s28, 1
        %s169 = scalar_lea.sflag [#allocation3], %s168
        %s170 = sand.u32 %s28, 1
        %s171 = smul.addr %s170, 8
        %s172 = scalar_lea.vmem [#allocation2], %s171
        %p173 = pneg %p41
        %p174 = pneg %p38
        %p175 = pneg %p62
        %p176 = pneg %p59
        %p177 = pneg %p83
        %p178 = pneg %p80
        %p179 = pneg %p109
        %p180 = pneg %p106
        %s181 = sand.u32 %s96, 1
        %s182 = scalar_lea.sflag [#allocation4], %s181
        %s183 = sand.u32 %s96, 1
        %s184 = smul.addr %s183, 8
        %s185 = scalar_lea.vmem [#allocation5], %s184
        %v186 = vld [vmem:[%s163] sm:$0xff]
        %v187 = vmul.f32 %v186, %v186
        %188 = vadd.xlane.f32.xlu0 %v187
        %v189 = vpop.xlane.xlu0 %188
        %v190 = vrcp.pop 128.0
        %v191 = vmul.f32 %v189, %v190
        %v192 = vadd.f32 %v191, 1e-05
        %v193 = vrsqrt.pop %v192
        %v194 = vmul.f32 %v186, %v193
        %v195 = vld [vmem:[%s1] sm:$0x1]
        %v196 = vld [vmem:[%s2] sm:$0x1]
        %v198 = vlaneseq
        %v199 = vshrl.u32 %v198, 7
        %v200 = vsub.s32 0, %v199
        %v201 = vrot.slane %v195, %v200
        %v203 = vmul.f32 %v201, %v194
        %v205 = vlaneseq
        %v206 = vshrl.u32 %v205, 7
        %v207 = vsub.s32 0, %v206
        %v208 = vrot.slane %v196, %v207
        %v210 = vadd.f32 %v203, %v208
        %211 = vst [vmem:[%s185] sm:$0xff] %v210
        %s212 = sand.u32 %s96, 1
        %s213 = scalar_lea.sflag [#allocation4], %s212
        %s214 = sand.u32 %s96, 1
        %s215 = smul.addr %s214, 8
        %s216 = scalar_lea.vmem [#allocation5], %s215
        // Predicated region
        $region37: #{tpu_custom_call.1} parent=31 // pred_check
          %p217 = pneg %p106
        $region38: #{tpu_custom_call.1} parent=31 // pred_check_branch
          %219 = sbr.rel (%p217) target = $region40
        $region39: #{tpu_custom_call.1} parent=31 // pred_region
          %s221 = ssub.s32 128, 128
          %222 = vsyncadd %s213, %s221
          %s223 = smul.addr %s20, 128
          %s224 = scalar_lea.hbm %s3, %s223
          %s226 = sshll.u32 %s216, 4
          %s227 = int_to_ptr.vmem [resolvable:$true] %s226
          %229 = dma.vmem_to_hbm [thread:$0]  %s227, 128, %s224, %s213
        $region40: #{tpu_custom_call.1} parent=31 // pred_fallthru
          _
      $region32: #{tpu_custom_call.1} parent=5 // pred_fallthru
        _
      %p230 = scmp.le.s32.totalorder 2, %s15
      // Predicated region
      $region41: #{tpu_custom_call.1} parent=5 // pred_check
        %p231 = pneg %p230
      $region42: #{tpu_custom_call.1} parent=5 // pred_check_branch
        %233 = sbr.rel (%p231) target = $region44
      $region43: #{tpu_custom_call.1} parent=5 // pred_region
        %s234 = ssub.s32 %s15, 2
        // Predicated region
        $region45: #{tpu_custom_call.1} parent=43 // pred_check
          %p235 = pneg %p112
        $region46: #{tpu_custom_call.1} parent=43 // pred_check_branch
          %237 = sbr.rel (%p235) target = $region48
        $region47: #{tpu_custom_call.1} parent=43 // pred_region
          %s238 = sand.u32 %s97, 1
          %s239 = scalar_lea.sflag [#allocation4], %s238
          %s240 = sand.u32 %s97, 1
          %s241 = smul.addr %s240, 8
          %s242 = scalar_lea.vmem [#allocation5], %s241
          %243 = dma.done %s239, 128
        $region48: #{tpu_custom_call.1} parent=43 // pred_fallthru
          _
      $region44: #{tpu_custom_call.1} parent=5 // pred_fallthru
        _
    $region6: #{tpu_custom_call.1} parent=1 // loop_footer
      %s19 = sadd.s32 1, %s15
    $region7: #{tpu_custom_call.1} parent=1 // loop_footer_branch
      %14 = sbr.rel target = $region3
    $region8: #{tpu_custom_call.1} parent=1 // loop_exit
      _
    %244 = vsyncpa [#allocation3], 1
    %s245 = scalar_lea.sflag [#allocation3], 1
    %246 = vsyncpa %s245, 1
    %247 = vsyncpa [#allocation4], 1
    %s248 = scalar_lea.sflag [#allocation4], 1
    %249 = vsyncpa %s248, 1

</llo_original>
